<compile_context>
chip_gen: v7x
topology: tpu7x:2x2x1
jax: 0.10.0
libtpu: 0.0.40
codegen_flags: <defaults>
</compile_context>

<pallas_src>
import jax
import jax.numpy as jnp
from jax.experimental import pallas as pl
from jax.experimental.pallas import tpu as pltpu

LANES = 128
SUBLANES = 8
MAX_TILE_ROWS = 4096  # (4096,128) f32 = 2 MiB/operand block; 2 ops x 2 bufs = 8 MiB VMEM


def _cdiv(a, b):
    return -(-a // b)


def _round_up(a, b):
    return _cdiv(a, b) * b


def _make_l1_partial_kernel(tile_rows):
    groups = tile_rows // SUBLANES

    def kernel(scale_ref, lhs_ref, rhs_ref, out_ref):
        # Upcast in-register (inputs may be bf16/f16); compute in f32.
        a = lhs_ref[...].astype(jnp.float32)
        b = rhs_ref[...].astype(jnp.float32)
        d = jnp.abs(a - b)
        # Fold sublane-groups with plain vector adds; keep the 128 lanes intact
        # (no XLU cross-lane reduction in the hot loop).
        partial = jnp.sum(d.reshape(groups, SUBLANES, LANES), axis=0)
        # Per-block 1/numel(pair) scale, read from the SMEM prefetch table.
        out_ref[0] = partial * scale_ref[pl.program_id(0)]

    return kernel


def feature_match_loss(features_lhs, features_rhs):
    """Pallas equivalent of FeatureMatchLoss.forward: sum of per-pair L1 means.

    Returns a shape-(1,) float32 array, matching torch.zeros(1) accumulation.
    """
    assert len(features_lhs) == len(features_rhs)
    if not features_lhs:
        return jnp.zeros((1,), jnp.float32)
    for lhs, rhs in zip(features_lhs, features_rhs):
        assert lhs.shape == rhs.shape, (lhs.shape, rhs.shape)

    dtypes = [x.dtype for x in features_lhs] + [x.dtype for x in features_rhs]
    common_dtype = jnp.result_type(*dtypes)
    itemsize = jnp.dtype(common_dtype).itemsize
    # Minimum sublane tile: 8 rows for 4-byte, 16 for 2-byte, 32 for 1-byte.
    min_rows = max(SUBLANES, 32 // itemsize)

    sizes = [int(x.size) for x in features_lhs]
    largest_rows = max(_cdiv(n, LANES) for n in sizes)
    tile_rows = min(MAX_TILE_ROWS, _round_up(largest_rows, min_rows))
    block_elems = tile_rows * LANES

    lhs_chunks, rhs_chunks, scales = [], [], []
    for lhs, rhs, n in zip(features_lhs, features_rhs, sizes):
        blocks_i = _cdiv(n, block_elems)
        padded = blocks_i * block_elems
        a = lhs.reshape(-1).astype(common_dtype)
        b = rhs.reshape(-1).astype(common_dtype)
        if padded != n:
            # Identical zero pad on both operands -> |a - b| = 0 on the pad;
            # it is fused by XLA into the single concat materialization below.
            a = jnp.pad(a, (0, padded - n))
            b = jnp.pad(b, (0, padded - n))
        lhs_chunks.append(a)
        rhs_chunks.append(b)
        scales.extend([1.0 / n] * blocks_i)

    a_all = jnp.concatenate(lhs_chunks).reshape(-1, LANES)
    b_all = jnp.concatenate(rhs_chunks).reshape(-1, LANES)
    block_scales = jnp.asarray(scales, dtype=jnp.float32)
    num_blocks = len(scales)
    total_elems = num_blocks * block_elems

    partials = pl.pallas_call(
        _make_l1_partial_kernel(tile_rows),
        out_shape=jax.ShapeDtypeStruct((num_blocks, SUBLANES, LANES), jnp.float32),
        grid_spec=pltpu.PrefetchScalarGridSpec(
            num_scalar_prefetch=1,
            grid=(num_blocks,),
            in_specs=[
                pl.BlockSpec((tile_rows, LANES), lambda i, s: (i, 0)),
                pl.BlockSpec((tile_rows, LANES), lambda i, s: (i, 0)),
            ],
            out_specs=pl.BlockSpec((1, SUBLANES, LANES), lambda i, s: (i, 0, 0)),
        ),
        compiler_params=pltpu.CompilerParams(
            dimension_semantics=("parallel",),
            vmem_limit_bytes=32 * 1024 * 1024,
        ),
        cost_estimate=pl.CostEstimate(
            flops=3 * total_elems,
            transcendentals=0,
            bytes_accessed=2 * total_elems * itemsize
            + num_blocks * SUBLANES * LANES * 4,
        ),
    )(block_scales, a_all, b_all)

    # Tiny final cross-lane/cross-block reduction in XLA; the per-pair 1/n_i
    # normalization is already folded into the partials.
    return jnp.sum(partials).reshape(1)


# ---------------- pure-JAX reference (correctness check only) ----------------
def _ref_loss(features_lhs, features_rhs):
    total = jnp.zeros((1,), jnp.float32)
    for lhs, rhs in zip(features_lhs, features_rhs):
        total = total + jnp.mean(jnp.abs(lhs.astype(jnp.float32)
                                         - rhs.astype(jnp.float32)))
    return total


if __name__ == "__main__":
    key = jax.random.PRNGKey(0)
    keys = jax.random.split(key, 6)

    # A small "discriminator feature pyramid": different shapes per level.
    shapes = [(2, 4, 16, 16), (2, 8, 8, 8), (2, 16, 4, 4)]
    features_lhs = [jax.random.normal(keys[i], s, jnp.float32)
                    for i, s in enumerate(shapes)]
    features_rhs = [jax.random.normal(keys[3 + i], s, jnp.float32)
                    for i, s in enumerate(shapes)]

    loss = feature_match_loss(features_lhs, features_rhs)
    loss = jax.block_until_ready(loss)

    ref = jax.block_until_ready(_ref_loss(features_lhs, features_rhs))
    assert loss.shape == (1,), loss.shape
    assert jnp.allclose(loss, ref, rtol=1e-5, atol=1e-6), (loss, ref)
    print("KERNEL_OK")
</pallas_src>

<mosaic_0001>
module attributes {stable_mosaic.version = 11 : i64} {
  func.func @kernel(%arg0: i32, %arg1: memref<3xf32, #tpu.memory_space<smem>>, %arg2: memref<16x128xf32, #tpu.memory_space<vmem>>, %arg3: memref<16x128xf32, #tpu.memory_space<vmem>>, %arg4: memref<1x8x128xf32, #tpu.memory_space<vmem>>) attributes {dimension_semantics = [#tpu.dimension_semantics<parallel>], iteration_bounds = array<i64: 3>, scalar_prefetch = 1 : i64, scratch_operands = 0 : i64, tpu.core_type = #tpu.core_type<tc>, window_params = [{transform_indices = @transform_0, window_bounds = array<i64: 16, 128>}, {transform_indices = @transform_1, window_bounds = array<i64: 16, 128>}, {transform_indices = @transform_2, window_bounds = array<i64: 1, 8, 128>}]} {
    %c0 = arith.constant 0 : index
    %c0_0 = arith.constant 0 : index
    %0 = vector.load %arg2[%c0, %c0_0] : memref<16x128xf32, #tpu.memory_space<vmem>>, vector<16x128xf32>
    %c0_1 = arith.constant 0 : index
    %c0_2 = arith.constant 0 : index
    %1 = vector.load %arg3[%c0_1, %c0_2] : memref<16x128xf32, #tpu.memory_space<vmem>>, vector<16x128xf32>
    %2 = arith.subf %0, %1 : vector<16x128xf32>
    %3 = math.absf %2 : vector<16x128xf32>
    %4 = vector.shape_cast %3 : vector<16x128xf32> to vector<2x8x128xf32>
    %cst = arith.constant dense<0.000000e+00> : vector<8x128xf32>
    %5 = vector.multi_reduction <add>, %4, %cst [0] : vector<2x8x128xf32> to vector<8x128xf32>
    %6 = arith.index_cast %arg0 : i32 to index
    %7 = memref.load %arg1[%6] : memref<3xf32, #tpu.memory_space<smem>>
    %8 = vector.broadcast %7 : f32 to vector<8x128xf32>
    %9 = arith.mulf %5, %8 : vector<8x128xf32>
    %c0_3 = arith.constant 0 : index
    %c0_4 = arith.constant 0 : index
    %c0_5 = arith.constant 0 : index
    %10 = vector.load %arg4[%c0_3, %c0_4, %c0_5] : memref<1x8x128xf32, #tpu.memory_space<vmem>>, vector<1x8x128xf32>
    %11 = vector.shape_cast %10 : vector<1x8x128xf32> to vector<8x128xf32>
    %12 = vector.shape_cast %9 : vector<8x128xf32> to vector<1x8x128xf32>
    tpu.vector_store %arg4[%c0_3, %c0_4, %c0_5], %12 {strides = array<i32>} : memref<1x8x128xf32, #tpu.memory_space<vmem>>, vector<1x8x128xf32>,
    return
  }
  func.func @transform_0(%arg0: i32, %arg1: memref<3xf32, #tpu.memory_space<smem>>) -> (i32, i32) {
    %c0_i32 = arith.constant 0 : i32
    %c0_i32_0 = arith.constant 0 : i32
    return %arg0, %c0_i32 : i32, i32
  }
  func.func @transform_1(%arg0: i32, %arg1: memref<3xf32, #tpu.memory_space<smem>>) -> (i32, i32) {
    %c0_i32 = arith.constant 0 : i32
    %c0_i32_0 = arith.constant 0 : i32
    return %arg0, %c0_i32 : i32, i32
  }
  func.func @transform_2(%arg0: i32, %arg1: memref<3xf32, #tpu.memory_space<smem>>) -> (i32, i32, i32) {
    %c0_i32 = arith.constant 0 : i32
    %c0_i32_0 = arith.constant 0 : i32
    %c0_i32_1 = arith.constant 0 : i32
    return %arg0, %c0_i32, %c0_i32_0 : i32, i32, i32
  }
}

</mosaic_0001>

<llo_original>
// kernel: tpu_custom_call.1
$region0: #{tpu_custom_call.1}
  #allocation0 [shape = 'u32[]', space=smem, size = 0x4, offset = 0x4, fixed_abs, tag = 'smem constant byte address 0x4 - core index']
  #allocation1 [shape = 'u32[144,128]{1,0:T(1,128)}', space=vmem, size = 0x12000, scoped, tag = 'internal scratch']
  #allocation2 [shape = 's32[1]{0}', space=sflag, size = 0x4, scoped, tag = 'scoped memory for tpu_custom_call.1']
  #allocation3 [shape = 'u8[512]{0}', space=smem, size = 0x200, scoped, tag = 'prefetched SMEM operand 0']
  %s0 = inlined_call_operand.hbm [shape: f32[3], index: 0, kind: input, shape index: {}]
  %s1 = inlined_call_operand.hbm [shape: f32[48,128], index: 1, kind: input, shape index: {}]
  %s2 = inlined_call_operand.hbm [shape: f32[48,128], index: 2, kind: input, shape index: {}]
  %s3 = inlined_call_operand.hbm [shape: f32[3,8,128], index: 3, kind: output, shape index: {}]
  %s4 = sld [smem:[#allocation0]]
  $region49: #{tpu_custom_call.1} parent=0
    _
  %s6 = ssub.s32 1, %s4
  %s7 = scalar_select 0, %s6, %s4
  %9 = dma.hbm_to_smem %s0, 16, [#allocation3], [#allocation2]
  %10 = dma.done [#allocation2], 16
  %11 = sfence
  $region1: #{tpu_custom_call.1} parent=0
    #allocation4 [shape = 'u8[16384]{0}', space=vmem, size = 0x4000, scoped, tag = 'input window, operand 1']
    #allocation5 [shape = 's32[2]{0}', space=sflag, size = 0x8, scoped, tag = 'scoped memory for tpu_custom_call.1']
    #allocation6 [shape = 's32[2]{0}', space=sflag, size = 0x8, scoped, tag = 'scoped memory for tpu_custom_call.1']
    #allocation7 [shape = 'u8[16384]{0}', space=vmem, size = 0x4000, scoped, tag = 'input window, operand 2']
    #allocation8 [shape = 's32[2]{0}', space=sflag, size = 0x8, scoped, tag = 'scoped memory for tpu_custom_call.1']
    #allocation9 [shape = 'u8[8192]{0}', space=vmem, size = 0x2000, scoped, tag = 'output window, operand 0']
    %12 = vsyncpa [#allocation5], 0
    %s13 = scalar_lea.sflag [#allocation5], 1
    %14 = vsyncpa %s13, 0
    %15 = vsyncpa [#allocation8], 0
    %s16 = scalar_lea.sflag [#allocation8], 1
    %17 = vsyncpa %s16, 0
    %18 = vsyncpa [#allocation6], 0
    %s19 = scalar_lea.sflag [#allocation6], 1
    %20 = vsyncpa %s19, 0
    loop: start=0, step=1, limit=5
    $region2: #{tpu_custom_call.1} parent=1 // loop_pre_header
      _
    $region3: #{tpu_custom_call.1} parent=1 // loop_header
      %s22 = sphi 0, %s26
      %p23 = scmp.ge.s32.totalorder %s22, 5
      %s32 = sphi 0, %s34
      %s35 = sphi 0, %s32
      %s36 = sphi 0, %s35
      %s52 = sphi 0, %s36
      %s58 = sphi 0, %s60
      %s61 = sphi 0, %s58
      %s62 = sphi 0, %s61
      %s78 = sphi 0, %s62
      %s84 = sphi 0, %s86
      %s87 = sphi 0, %s84
      %s88 = sphi 0, %s87
      %s104 = sphi 0, %s88
    $region4: #{tpu_custom_call.1} parent=1 // loop_header_branch
      %25 = sbr.rel (%p23) target = $region8
    $region5: #{tpu_custom_call.1} parent=1 // loop_body
      %s27 = ssub.s32 %s22, 1
      %s28 = ssub.s32 %s22, 2
      %s29 = sadd.s32 %s22, 1
      %s30 = ssub.s32 %s22, %s29
      %p31 = scmp.eq.s32.totalorder %s30, 0
      %s33 = sadd.s32 %s32, 1
      %s34 = scalar_select %p31, %s32, %s33
      %p37 = pneg %p31
      %p38 = scmp.eq.s32.totalorder %s22, 2
      %p39 = por %p37, %p38
      %p40 = scmp.ne.s32.totalorder %s32, %s35
      %p41 = scmp.eq.s32.totalorder %s22, 0
      %p42 = por %p40, %p41
      %p43 = scmp.ne.s32.totalorder %s32, %s35
      %p44 = scmp.eq.s32.totalorder %s27, 2
      %p45 = por %p43, %p44
      %p46 = scmp.ne.s32.totalorder %s35, %s36
      %p47 = scmp.eq.s32.totalorder %s27, 0
      %p48 = por %p46, %p47
      %p49 = scmp.ne.s32.totalorder %s35, %s36
      %p50 = scmp.eq.s32.totalorder %s28, 2
      %p51 = por %p49, %p50
      %p53 = scmp.ne.s32.totalorder %s36, %s52
      %p54 = scmp.eq.s32.totalorder %s28, 0
      %p55 = por %p53, %p54
      %s56 = ssub.s32 %s22, %s29
      %p57 = scmp.eq.s32.totalorder %s56, 0
      %s59 = sadd.s32 %s58, 1
      %s60 = scalar_select %p57, %s58, %s59
      %p63 = pneg %p57
      %p64 = scmp.eq.s32.totalorder %s22, 2
      %p65 = por %p63, %p64
      %p66 = scmp.ne.s32.totalorder %s58, %s61
      %p67 = scmp.eq.s32.totalorder %s22, 0
      %p68 = por %p66, %p67
      %p69 = scmp.ne.s32.totalorder %s58, %s61
      %p70 = scmp.eq.s32.totalorder %s27, 2
      %p71 = por %p69, %p70
      %p72 = scmp.ne.s32.totalorder %s61, %s62
      %p73 = scmp.eq.s32.totalorder %s27, 0
      %p74 = por %p72, %p73
      %p75 = scmp.ne.s32.totalorder %s61, %s62
      %p76 = scmp.eq.s32.totalorder %s28, 2
      %p77 = por %p75, %p76
      %p79 = scmp.ne.s32.totalorder %s62, %s78
      %p80 = scmp.eq.s32.totalorder %s28, 0
      %p81 = por %p79, %p80
      %s82 = ssub.s32 %s22, %s29
      %p83 = scmp.eq.s32.totalorder %s82, 0
      %s85 = sadd.s32 %s84, 1
      %s86 = scalar_select %p83, %s84, %s85
      %p89 = pneg %p83
      %p90 = scmp.eq.s32.totalorder %s22, 2
      %p91 = por %p89, %p90
      %p92 = scmp.ne.s32.totalorder %s84, %s87
      %p93 = scmp.eq.s32.totalorder %s22, 0
      %p94 = por %p92, %p93
      %p95 = scmp.ne.s32.totalorder %s84, %s87
      %p96 = scmp.eq.s32.totalorder %s27, 2
      %p97 = por %p95, %p96
      %p98 = scmp.ne.s32.totalorder %s87, %s88
      %p99 = scmp.eq.s32.totalorder %s27, 0
      %p100 = por %p98, %p99
      %p101 = scmp.ne.s32.totalorder %s87, %s88
      %p102 = scmp.eq.s32.totalorder %s28, 2
      %p103 = por %p101, %p102
      %p105 = scmp.ne.s32.totalorder %s88, %s104
      %p106 = scmp.eq.s32.totalorder %s28, 0
      %p107 = por %p105, %p106
      %p108 = scmp.le.s32.totalorder 1, %s22
      %p109 = scmp.lt.s32.totalorder %s22, 4
      %p110 = pnand %p108, %p109
      %p111 = pneg %p110
      // Predicated region
      $region9: #{tpu_custom_call.1} parent=5 // pred_check
        _
      $region10: #{tpu_custom_call.1} parent=5 // pred_check_branch
        %113 = sbr.rel (%p110) target = $region12
      $region11: #{tpu_custom_call.1} parent=5 // pred_region
        %s114 = ssub.s32 %s22, 1
      $region12: #{tpu_custom_call.1} parent=5 // pred_fallthru
        _
      %p115 = scmp.lt.s32.totalorder %s22, 3
      // Predicated region
      $region13: #{tpu_custom_call.1} parent=5 // pred_check
        %p116 = pneg %p115
      $region14: #{tpu_custom_call.1} parent=5 // pred_check_branch
        %118 = sbr.rel (%p116) target = $region16
      $region15: #{tpu_custom_call.1} parent=5 // pred_region
        // Predicated region
        $region17: #{tpu_custom_call.1} parent=15 // pred_check
          %p119 = pneg %p42
        $region18: #{tpu_custom_call.1} parent=15 // pred_check_branch
          %121 = sbr.rel (%p119) target = $region20
        $region19: #{tpu_custom_call.1} parent=15 // pred_region
          %s122 = sand.u32 %s32, 1
          %s123 = scalar_lea.sflag [#allocation5], %s122
          %s124 = sand.u32 %s32, 1
          %s125 = smul.addr %s124, 16
          %s126 = scalar_lea.vmem [#allocation4], %s125
          %s127 = smul.u32 2, %s22
          %s129 = ssub.s32 256, 256
          %130 = vsyncadd %s123, %s129
          %s131 = smul.addr %s127, 128
          %s132 = scalar_lea.hbm %s1, %s131
          %s133 = sshll.u32 %s126, 4
          %s134 = int_to_ptr.vmem [resolvable:$true] %s133
          %139 = dma.hbm_to_vmem [thread:$0]  %s132, 256, %s134, %s123, 128, 128, 8
        $region20: #{tpu_custom_call.1} parent=15 // pred_fallthru
          _
        // Predicated region
        $region21: #{tpu_custom_call.1} parent=15 // pred_check
          %p140 = pneg %p68
        $region22: #{tpu_custom_call.1} parent=15 // pred_check_branch
          %142 = sbr.rel (%p140) target = $region24
        $region23: #{tpu_custom_call.1} parent=15 // pred_region
          %s143 = sand.u32 %s58, 1
          %s144 = scalar_lea.sflag [#allocation8], %s143
          %s145 = sand.u32 %s58, 1
          %s146 = smul.addr %s145, 16
          %s147 = scalar_lea.vmem [#allocation7], %s146
          %s148 = smul.u32 2, %s22
          %s150 = ssub.s32 256, 256
          %151 = vsyncadd %s144, %s150
          %s152 = smul.addr %s148, 128
          %s153 = scalar_lea.hbm %s2, %s152
          %s154 = sshll.u32 %s147, 4
          %s155 = int_to_ptr.vmem [resolvable:$true] %s154
          %160 = dma.hbm_to_vmem [thread:$0]  %s153, 256, %s155, %s144, 128, 128, 8
        $region24: #{tpu_custom_call.1} parent=15 // pred_fallthru
          _
      $region16: #{tpu_custom_call.1} parent=5 // pred_fallthru
        _
      %p161 = scmp.le.s32.totalorder 1, %s22
      %p162 = scmp.lt.s32.totalorder %s22, 4
      %p163 = pnand %p161, %p162
      %p164 = pneg %p163
      // Predicated region
      $region25: #{tpu_custom_call.1} parent=5 // pred_check
        _
      $region26: #{tpu_custom_call.1} parent=5 // pred_check_branch
        %166 = sbr.rel (%p163) target = $region28
      $region27: #{tpu_custom_call.1} parent=5 // pred_region
        %s167 = ssub.s32 %s22, 1
        %s168 = sand.u32 %s35, 1
        %s169 = scalar_lea.sflag [#allocation5], %s168
        %s170 = sand.u32 %s35, 1
        %s171 = smul.addr %s170, 16
        %s172 = scalar_lea.vmem [#allocation4], %s171
        // Predicated region
        $region29: #{tpu_custom_call.1} parent=27 // pred_check
          %p173 = pneg %p48
        $region30: #{tpu_custom_call.1} parent=27 // pred_check_branch
          %175 = sbr.rel (%p173) target = $region32
        $region31: #{tpu_custom_call.1} parent=27 // pred_region
          %176 = dma.done %s169, 256
        $region32: #{tpu_custom_call.1} parent=27 // pred_fallthru
          _
        %s177 = sand.u32 %s61, 1
        %s178 = scalar_lea.sflag [#allocation8], %s177
        %s179 = sand.u32 %s61, 1
        %s180 = smul.addr %s179, 16
        %s181 = scalar_lea.vmem [#allocation7], %s180
        // Predicated region
        $region33: #{tpu_custom_call.1} parent=27 // pred_check
          %p182 = pneg %p74
        $region34: #{tpu_custom_call.1} parent=27 // pred_check_branch
          %184 = sbr.rel (%p182) target = $region36
        $region35: #{tpu_custom_call.1} parent=27 // pred_region
          %185 = dma.done %s178, 256
        $region36: #{tpu_custom_call.1} parent=27 // pred_fallthru
          _
        %s186 = sand.u32 %s35, 1
        %s187 = scalar_lea.sflag [#allocation5], %s186
        %s188 = sand.u32 %s35, 1
        %s189 = smul.addr %s188, 16
        %s190 = scalar_lea.vmem [#allocation4], %s189
        %p191 = pneg %p48
        %p192 = pneg %p45
        %s193 = sand.u32 %s61, 1
        %s194 = scalar_lea.sflag [#allocation8], %s193
        %s195 = sand.u32 %s61, 1
        %s196 = smul.addr %s195, 16
        %s197 = scalar_lea.vmem [#allocation7], %s196
        %p198 = pneg %p74
        %p199 = pneg %p71
        %p200 = pneg %p100
        %p201 = pneg %p97
        %s202 = sand.u32 %s87, 1
        %s203 = scalar_lea.sflag [#allocation6], %s202
        %s204 = sand.u32 %s87, 1
        %s205 = smul.addr %s204, 8
        %s206 = scalar_lea.vmem [#allocation9], %s205
        %s207 = smul.u32 2, %s27
        %s208 = smul.u32 2, %s27
        %v209 = vld [vmem:[%s172] sm:$0xff]
        %v210 = vld [vmem:[%s172 + $0x8] sm:$0xff]
        %v211 = vld [vmem:[%s181] sm:$0xff]
        %v212 = vld [vmem:[%s181 + $0x8] sm:$0xff]
        %v213 = vsub.f32 %v209, %v211
        %v214 = vsub.f32 %v210, %v212
        %v215 = vand.u32 2147483647, %v213
        %v216 = vand.u32 2147483647, %v214
        %v217 = vadd.f32 %v215, %v216
        %s218 = sld [smem:[#allocation3 + %s27]]
        %v219 = vstv %s218
        %v220 = vmul.f32 %v217, %v219
        %221 = vst [vmem:[%s206] sm:$0xff] %v220
        %s222 = sand.u32 %s87, 1
        %s223 = scalar_lea.sflag [#allocation6], %s222
        %s224 = sand.u32 %s87, 1
        %s225 = smul.addr %s224, 8
        %s226 = scalar_lea.vmem [#allocation9], %s225
        // Predicated region
        $region37: #{tpu_custom_call.1} parent=27 // pred_check
          %p227 = pneg %p97
        $region38: #{tpu_custom_call.1} parent=27 // pred_check_branch
          %229 = sbr.rel (%p227) target = $region40
        $region39: #{tpu_custom_call.1} parent=27 // pred_region
          %s231 = ssub.s32 128, 128
          %232 = vsyncadd %s223, %s231
          %s233 = smul.addr %s27, 128
          %s234 = scalar_lea.hbm %s3, %s233
          %s236 = sshll.u32 %s226, 4
          %s237 = int_to_ptr.vmem [resolvable:$true] %s236
          %239 = dma.vmem_to_hbm [thread:$0]  %s237, 128, %s234, %s223
        $region40: #{tpu_custom_call.1} parent=27 // pred_fallthru
          _
      $region28: #{tpu_custom_call.1} parent=5 // pred_fallthru
        _
      %p240 = scmp.le.s32.totalorder 2, %s22
      // Predicated region
      $region41: #{tpu_custom_call.1} parent=5 // pred_check
        %p241 = pneg %p240
      $region42: #{tpu_custom_call.1} parent=5 // pred_check_branch
        %243 = sbr.rel (%p241) target = $region44
      $region43: #{tpu_custom_call.1} parent=5 // pred_region
        %s244 = ssub.s32 %s22, 2
        // Predicated region
        $region45: #{tpu_custom_call.1} parent=43 // pred_check
          %p245 = pneg %p103
        $region46: #{tpu_custom_call.1} parent=43 // pred_check_branch
          %247 = sbr.rel (%p245) target = $region48
        $region47: #{tpu_custom_call.1} parent=43 // pred_region
          %s248 = sand.u32 %s88, 1
          %s249 = scalar_lea.sflag [#allocation6], %s248
          %s250 = sand.u32 %s88, 1
          %s251 = smul.addr %s250, 8
          %s252 = scalar_lea.vmem [#allocation9], %s251
          %253 = dma.done %s249, 128
        $region48: #{tpu_custom_call.1} parent=43 // pred_fallthru
          _
      $region44: #{tpu_custom_call.1} parent=5 // pred_fallthru
        _
    $region6: #{tpu_custom_call.1} parent=1 // loop_footer
      %s26 = sadd.s32 1, %s22
    $region7: #{tpu_custom_call.1} parent=1 // loop_footer_branch
      %21 = sbr.rel target = $region3
    $region8: #{tpu_custom_call.1} parent=1 // loop_exit
      _
    %254 = vsyncpa [#allocation5], 1
    %s255 = scalar_lea.sflag [#allocation5], 1
    %256 = vsyncpa %s255, 1
    %257 = vsyncpa [#allocation8], 1
    %s258 = scalar_lea.sflag [#allocation8], 1
    %259 = vsyncpa %s258, 1
    %260 = vsyncpa [#allocation6], 1
    %s261 = scalar_lea.sflag [#allocation6], 1
    %262 = vsyncpa %s261, 1

</llo_original>
